<compile_context>
chip_gen: v6e
topology: v6e:2x2x1
jax: 0.10.0
libtpu: 0.0.40
codegen_flags: <defaults>
</compile_context>

<pallas_src>
import jax
import jax.numpy as jnp
from jax.experimental import pallas as pl
from jax.experimental.pallas import tpu as pltpu

LN_EPS = 1e-5  # PyTorch nn.LayerNorm default


def projection_kernel(x_ref, w_ref, b_ref, g_ref, beta_ref, o_ref):
    # tanh(x) in f32 (required on v5e; negligible cost elsewhere).
    x = jnp.tanh(x_ref[...].astype(jnp.float32))

    # fc: x @ W + b -- MXU matmul. Feed the MXU the weight's native dtype
    # (bf16 weights are NOT upcast), accumulate in f32.
    y = jnp.dot(x.astype(w_ref.dtype), w_ref[...],
                preferred_element_type=jnp.float32)
    y = y + b_ref[...].astype(jnp.float32)          # (1, P) broadcast over rows

    # LayerNorm over the projection dim (full P per block -> single XLU pass).
    mean = jnp.mean(y, axis=-1, keepdims=True)
    centered = y - mean
    var = jnp.mean(centered * centered, axis=-1, keepdims=True)
    inv = jax.lax.rsqrt(var + LN_EPS)
    out = centered * inv * g_ref[...].astype(jnp.float32) \
        + beta_ref[...].astype(jnp.float32)
    o_ref[...] = out.astype(o_ref.dtype)


def _pick_batch_tile(B, H, P, x_itemsize, w_itemsize, budget=24 * 1024 * 1024):
    """Largest power-of-two batch tile (<=512) whose double-buffered VMEM
    footprint (x tile + out tile + resident params) fits the budget."""
    # Resident params are double-buffered by the default pipeline: W + b/g/beta.
    fixed = 2 * (H * P + 3 * P) * w_itemsize
    tb = 512
    while tb > 8 and fixed + 2 * tb * (H * x_itemsize + P * 4) > budget:
        tb //= 2
    if B <= tb:
        return B          # full batch as one block ("equal full dim" is legal)
    return tb             # power of two >= 8 -> satisfies the sublane rule


def projection_forward(x, w_t, b, gamma, beta):
    """x: (B, H); w_t: (H, P) (transposed PyTorch fc.weight);
    b, gamma, beta: (P,) or (1, P)."""
    B, H = x.shape
    P = w_t.shape[1]

    b2 = jnp.reshape(b, (1, P))
    g2 = jnp.reshape(gamma, (1, P))
    beta2 = jnp.reshape(beta, (1, P))

    tb = _pick_batch_tile(B, H, P, x.dtype.itemsize, w_t.dtype.itemsize)
    grid = (pl.cdiv(B, tb),)

    cost = pl.CostEstimate(
        flops=2 * B * H * P + 8 * B * P,
        transcendentals=B * H + B,  # tanh per element + rsqrt per row
        bytes_accessed=(x.size * x.dtype.itemsize
                        + w_t.size * w_t.dtype.itemsize
                        + 3 * P * w_t.dtype.itemsize
                        + B * P * x.dtype.itemsize),
    )

    return pl.pallas_call(
        projection_kernel,
        out_shape=jax.ShapeDtypeStruct((B, P), x.dtype),
        grid_spec=pltpu.PrefetchScalarGridSpec(
            num_scalar_prefetch=0,
            grid=grid,
            in_specs=[
                pl.BlockSpec((tb, H), lambda i: (i, 0)),   # batch-tiled input
                pl.BlockSpec((H, P), lambda i: (0, 0)),    # resident weight
                pl.BlockSpec((1, P), lambda i: (0, 0)),    # resident bias
                pl.BlockSpec((1, P), lambda i: (0, 0)),    # resident gamma
                pl.BlockSpec((1, P), lambda i: (0, 0)),    # resident beta
            ],
            out_specs=pl.BlockSpec((tb, P), lambda i: (i, 0)),
        ),
        compiler_params=pltpu.CompilerParams(
            dimension_semantics=("parallel",)),  # megacore sharding on v7x
        cost_estimate=cost,
    )(x, w_t, b2, g2, beta2)


if __name__ == "__main__":
    batch = 8
    hidden_size = 32
    projection_size = 128

    key = jax.random.PRNGKey(0)
    k_x, k_w = jax.random.split(key)

    # Example input (what PyTorch would see as `text` of shape (batch, dim)).
    x = jax.random.normal(k_x, (batch, hidden_size), dtype=jnp.float32)

    # Deterministic parameter init mirroring Projection.init_weights():
    #   fc.weight ~ U(-0.01, 0.01), fc.bias = 0
    #   ln.weight = 1, ln.bias = 0 (PyTorch LayerNorm defaults)
    initrange = 0.01
    fc_weight = jax.random.uniform(
        k_w, (projection_size, hidden_size),
        minval=-initrange, maxval=initrange, dtype=jnp.float32)
    fc_bias = jnp.zeros((projection_size,), dtype=jnp.float32)
    ln_gamma = jnp.ones((projection_size,), dtype=jnp.float32)
    ln_beta = jnp.zeros((projection_size,), dtype=jnp.float32)

    # Kernel-friendly layout: pre-transposed weight so the kernel does x @ W.
    w_t = fc_weight.T                     # (H, P)

    out = projection_forward(x, w_t, fc_bias, ln_gamma, ln_beta)
    out = jax.block_until_ready(out)

    # Pure-JAX reference for a sanity check.
    y_ref = jnp.tanh(x) @ w_t + fc_bias[None, :]
    mean = jnp.mean(y_ref, axis=-1, keepdims=True)
    var = jnp.mean((y_ref - mean) ** 2, axis=-1, keepdims=True)
    ref = ((y_ref - mean) * jax.lax.rsqrt(var + LN_EPS)
           * ln_gamma[None, :] + ln_beta[None, :])
    assert out.shape == (batch, projection_size)
    assert jnp.allclose(out, ref, atol=1e-5, rtol=1e-5)

    print("KERNEL_OK")
</pallas_src>

<mosaic_0001>
module attributes {stable_mosaic.version = 11 : i64} {
  func.func @projection_kernel(%arg0: i32, %arg1: memref<8x32xf32, #tpu.memory_space<vmem>>, %arg2: memref<32x128xf32, #tpu.memory_space<vmem>>, %arg3: memref<1x128xf32, #tpu.memory_space<vmem>>, %arg4: memref<1x128xf32, #tpu.memory_space<vmem>>, %arg5: memref<1x128xf32, #tpu.memory_space<vmem>>, %arg6: memref<8x128xf32, #tpu.memory_space<vmem>>) attributes {dimension_semantics = [#tpu.dimension_semantics<parallel>], iteration_bounds = array<i64: 1>, scalar_prefetch = 0 : i64, scratch_operands = 0 : i64, tpu.core_type = #tpu.core_type<tc>, window_params = [{transform_indices = @transform_0, window_bounds = array<i64: 8, 32>}, {pipeline_mode = #tpu.pipeline_mode<synchronous>, transform_indices = @transform_1, window_bounds = array<i64: 32, 128>}, {pipeline_mode = #tpu.pipeline_mode<synchronous>, transform_indices = @transform_2, window_bounds = array<i64: 1, 128>}, {pipeline_mode = #tpu.pipeline_mode<synchronous>, transform_indices = @transform_3, window_bounds = array<i64: 1, 128>}, {pipeline_mode = #tpu.pipeline_mode<synchronous>, transform_indices = @transform_4, window_bounds = array<i64: 1, 128>}, {transform_indices = @transform_5, window_bounds = array<i64: 8, 128>}]} {
    %c0 = arith.constant 0 : index
    %c0_0 = arith.constant 0 : index
    %0 = vector.load %arg1[%c0, %c0_0] : memref<8x32xf32, #tpu.memory_space<vmem>>, vector<8x32xf32>
    %1 = math.tanh %0 : vector<8x32xf32>
    %c0_1 = arith.constant 0 : index
    %c0_2 = arith.constant 0 : index
    %2 = vector.load %arg2[%c0_1, %c0_2] : memref<32x128xf32, #tpu.memory_space<vmem>>, vector<32x128xf32>
    %cst = arith.constant dense<0.000000e+00> : vector<8x128xf32>
    %3 = tpu.matmul %1, %2, %cst {dimension_numbers = #tpu.dot_dimension_numbers<[1], [0], [0], [1], [0, 0, 1, 1], [], []>} : vector<8x32xf32>, vector<32x128xf32>, vector<8x128xf32> -> vector<8x128xf32>
    %c0_3 = arith.constant 0 : index
    %c0_4 = arith.constant 0 : index
    %4 = vector.load %arg3[%c0_3, %c0_4] : memref<1x128xf32, #tpu.memory_space<vmem>>, vector<1x128xf32>
    %5 = vector.broadcast %4 : vector<1x128xf32> to vector<8x128xf32>
    %6 = arith.addf %3, %5 : vector<8x128xf32>
    %cst_5 = arith.constant dense<0.000000e+00> : vector<8xf32>
    %7 = vector.multi_reduction <add>, %6, %cst_5 [1] : vector<8x128xf32> to vector<8xf32>
    %8 = vector.shape_cast %7 : vector<8xf32> to vector<8x1xf32>
    %cst_6 = arith.constant 1.280000e+02 : f32
    %9 = vector.broadcast %cst_6 : f32 to vector<8x1xf32>
    %10 = arith.divf %8, %9 : vector<8x1xf32>
    %11 = vector.broadcast %10 : vector<8x1xf32> to vector<8x128xf32>
    %12 = arith.subf %6, %11 : vector<8x128xf32>
    %13 = arith.mulf %12, %12 : vector<8x128xf32>
    %cst_7 = arith.constant dense<0.000000e+00> : vector<8xf32>
    %14 = vector.multi_reduction <add>, %13, %cst_7 [1] : vector<8x128xf32> to vector<8xf32>
    %15 = vector.shape_cast %14 : vector<8xf32> to vector<8x1xf32>
    %cst_8 = arith.constant 1.280000e+02 : f32
    %16 = vector.broadcast %cst_8 : f32 to vector<8x1xf32>
    %17 = arith.divf %15, %16 : vector<8x1xf32>
    %cst_9 = arith.constant 9.99999974E-6 : f32
    %18 = vector.broadcast %cst_9 : f32 to vector<8x1xf32>
    %19 = arith.addf %17, %18 : vector<8x1xf32>
    %20 = math.rsqrt %19 : vector<8x1xf32>
    %21 = vector.broadcast %20 : vector<8x1xf32> to vector<8x128xf32>
    %22 = arith.mulf %12, %21 : vector<8x128xf32>
    %c0_10 = arith.constant 0 : index
    %c0_11 = arith.constant 0 : index
    %23 = vector.load %arg4[%c0_10, %c0_11] : memref<1x128xf32, #tpu.memory_space<vmem>>, vector<1x128xf32>
    %24 = vector.broadcast %23 : vector<1x128xf32> to vector<8x128xf32>
    %25 = arith.mulf %22, %24 : vector<8x128xf32>
    %c0_12 = arith.constant 0 : index
    %c0_13 = arith.constant 0 : index
    %26 = vector.load %arg5[%c0_12, %c0_13] : memref<1x128xf32, #tpu.memory_space<vmem>>, vector<1x128xf32>
    %27 = vector.broadcast %26 : vector<1x128xf32> to vector<8x128xf32>
    %28 = arith.addf %25, %27 : vector<8x128xf32>
    %c0_14 = arith.constant 0 : index
    %c0_15 = arith.constant 0 : index
    %29 = vector.load %arg6[%c0_14, %c0_15] : memref<8x128xf32, #tpu.memory_space<vmem>>, vector<8x128xf32>
    tpu.vector_store %arg6[%c0_14, %c0_15], %28 {strides = array<i32>} : memref<8x128xf32, #tpu.memory_space<vmem>>, vector<8x128xf32>,
    return
  }
  func.func @transform_0(%arg0: i32) -> (i32, i32) {
    %c0_i32 = arith.constant 0 : i32
    %c0_i32_0 = arith.constant 0 : i32
    return %arg0, %c0_i32 : i32, i32
  }
  func.func @transform_1(%arg0: i32) -> (i32, i32) {
    %c0_i32 = arith.constant 0 : i32
    %c0_i32_0 = arith.constant 0 : i32
    %c0_i32_1 = arith.constant 0 : i32
    return %c0_i32, %c0_i32_0 : i32, i32
  }
  func.func @transform_2(%arg0: i32) -> (i32, i32) {
    %c0_i32 = arith.constant 0 : i32
    %c0_i32_0 = arith.constant 0 : i32
    %c0_i32_1 = arith.constant 0 : i32
    return %c0_i32, %c0_i32_0 : i32, i32
  }
  func.func @transform_3(%arg0: i32) -> (i32, i32) {
    %c0_i32 = arith.constant 0 : i32
    %c0_i32_0 = arith.constant 0 : i32
    %c0_i32_1 = arith.constant 0 : i32
    return %c0_i32, %c0_i32_0 : i32, i32
  }
  func.func @transform_4(%arg0: i32) -> (i32, i32) {
    %c0_i32 = arith.constant 0 : i32
    %c0_i32_0 = arith.constant 0 : i32
    %c0_i32_1 = arith.constant 0 : i32
    return %c0_i32, %c0_i32_0 : i32, i32
  }
  func.func @transform_5(%arg0: i32) -> (i32, i32) {
    %c0_i32 = arith.constant 0 : i32
    %c0_i32_0 = arith.constant 0 : i32
    return %arg0, %c0_i32 : i32, i32
  }
}

</mosaic_0001>

<llo_original>
// kernel: tpu_custom_call.1
$region0: #{tpu_custom_call.1}
  #allocation0 [shape = 'u32[]', space=smem, size = 0x4, offset = 0x4, fixed_abs, tag = 'smem constant byte address 0x4 - core index']
  #allocation1 [shape = 'u32[144,128]{1,0:T(1,128)}', space=vmem, size = 0x12000, scoped, tag = 'internal scratch']
  %s0 = inlined_call_operand.hbm [shape: f32[8,32], index: 0, kind: input, shape index: {}]
  %s1 = inlined_call_operand.hbm [shape: f32[32,128], index: 1, kind: input, shape index: {}]
  %s2 = inlined_call_operand.vmem [shape: f32[1,128], index: 2, kind: input, shape index: {}]
  %s3 = inlined_call_operand.vmem [shape: f32[1,128], index: 3, kind: input, shape index: {}]
  %s4 = inlined_call_operand.vmem [shape: f32[1,128], index: 4, kind: input, shape index: {}]
  %s5 = inlined_call_operand.hbm [shape: f32[8,128], index: 5, kind: output, shape index: {}]
  %s6 = sld [smem:[#allocation0]]
  $region38: #{tpu_custom_call.1} parent=0
    _
  %s8 = ssub.s32 1, %s6
  %s9 = scalar_select 0, %s8, %s6
  $region1: #{tpu_custom_call.1} parent=0
    #allocation2 [shape = 'u8[4096]{0}', space=vmem, size = 0x1000, scoped, tag = 'input window, operand 0, single buffered']
    #allocation3 [shape = 's32[1]{0}', space=sflag, size = 0x4, scoped, tag = 'scoped memory for tpu_custom_call.1']
    #allocation4 [shape = 's32[1]{0}', space=sflag, size = 0x4, scoped, tag = 'scoped memory for tpu_custom_call.1']
    #allocation5 [shape = 'u8[16384]{0}', space=vmem, size = 0x4000, scoped, tag = 'input window, operand 1, single buffered']
    #allocation6 [shape = 's32[1]{0}', space=sflag, size = 0x4, scoped, tag = 'scoped memory for tpu_custom_call.1']
    #allocation7 [shape = 'u8[4096]{0}', space=vmem, size = 0x1000, scoped, tag = 'output window, operand 0, single buffered']
    %10 = vsyncpa [#allocation3], 0
    %11 = vsyncpa [#allocation6], 0
    %12 = vsyncpa [#allocation4], 0
    // Predicated region
    $region2: #{tpu_custom_call.1} parent=1 // pred_check
      _
    $region3: #{tpu_custom_call.1} parent=1 // pred_check_branch
      %14 = sbr.rel (0) target = $region5
    $region4: #{tpu_custom_call.1} parent=1 // pred_region
      %s16 = ssub.s32 128, 128
      %17 = vsyncadd [#allocation3], %s16
      %s19 = sshll.u32 [#allocation2], 4
      %s20 = int_to_ptr.vmem [resolvable:$true] %s19
      %22 = dma.hbm_to_vmem [thread:$0]  %s0, 128, %s20, [#allocation3]
    $region5: #{tpu_custom_call.1} parent=1 // pred_fallthru
      _
    // Predicated region
    $region6: #{tpu_custom_call.1} parent=1 // pred_check
      _
    $region7: #{tpu_custom_call.1} parent=1 // pred_check_branch
      %24 = sbr.rel (0) target = $region9
    $region8: #{tpu_custom_call.1} parent=1 // pred_region
      %s26 = ssub.s32 512, 512
      %27 = vsyncadd [#allocation6], %s26
      %s28 = sshll.u32 [#allocation5], 4
      %s29 = int_to_ptr.vmem [resolvable:$true] %s28
      %34 = dma.hbm_to_vmem [thread:$0]  %s1, 512, %s29, [#allocation6], 128, 128, 8
    $region9: #{tpu_custom_call.1} parent=1 // pred_fallthru
      _
    // Predicated region
    $region10: #{tpu_custom_call.1} parent=1 // pred_check
      _
    $region11: #{tpu_custom_call.1} parent=1 // pred_check_branch
      %36 = sbr.rel (0) target = $region13
    $region12: #{tpu_custom_call.1} parent=1 // pred_region
      _
    $region13: #{tpu_custom_call.1} parent=1 // pred_fallthru
      _
    // Predicated region
    $region14: #{tpu_custom_call.1} parent=1 // pred_check
      _
    $region15: #{tpu_custom_call.1} parent=1 // pred_check_branch
      %38 = sbr.rel (0) target = $region17
    $region16: #{tpu_custom_call.1} parent=1 // pred_region
      _
    $region17: #{tpu_custom_call.1} parent=1 // pred_fallthru
      _
    // Predicated region
    $region18: #{tpu_custom_call.1} parent=1 // pred_check
      _
    $region19: #{tpu_custom_call.1} parent=1 // pred_check_branch
      %40 = sbr.rel (0) target = $region21
    $region20: #{tpu_custom_call.1} parent=1 // pred_region
      _
    $region21: #{tpu_custom_call.1} parent=1 // pred_fallthru
      _
    // Predicated region
    $region22: #{tpu_custom_call.1} parent=1 // pred_check
      _
    $region23: #{tpu_custom_call.1} parent=1 // pred_check_branch
      %42 = sbr.rel (0) target = $region25
    $region24: #{tpu_custom_call.1} parent=1 // pred_region
      %43 = dma.done [#allocation3], 128
    $region25: #{tpu_custom_call.1} parent=1 // pred_fallthru
      _
    // Predicated region
    $region26: #{tpu_custom_call.1} parent=1 // pred_check
      _
    $region27: #{tpu_custom_call.1} parent=1 // pred_check_branch
      %45 = sbr.rel (0) target = $region29
    $region28: #{tpu_custom_call.1} parent=1 // pred_region
      %46 = dma.done [#allocation6], 512
    $region29: #{tpu_custom_call.1} parent=1 // pred_fallthru
      _
    %v47 = vld [vmem:[#allocation2] sm:$0xff]
    %v48 = vtanh.pop %v47
    %v49 = vld [vmem:[#allocation5] sm:$0xff]
    %v50 = vld [vmem:[#allocation5 + $0x8] sm:$0xff]
    %v51 = vld [vmem:[#allocation5 + $0x10] sm:$0xff]
    %v52 = vld [vmem:[#allocation5 + $0x18] sm:$0xff]
    %v53 = vld [vmem:[%s2] sm:$0x1]
    %v55 = vlaneseq
    %v56 = vshrl.u32 %v55, 7
    %v57 = vsub.s32 0, %v56
    %v58 = vrot.slane %v53, %v57
    %vm60 = vcmask 261120
    %v62 = vsel %vm60, %v48, 0
    %64 = vmatprep.subr.mxu0 0.0
    %65 = vmatpush1.msra.mxu0 0.0
    %66 = vmatprep.subr.mxu0 0.0
    %67 = vmatpush1.msra.mxu0 0.0
    %68 = vmatprep.subr.mxu0 0.0
    %69 = vmatpush1.msra.mxu0 0.0
    %70 = vmatprep.subr.mxu0 0.0
    %71 = vmatpush1.msra.mxu0 0.0
    %72 = vmatprep.subr.mxu0 0.0
    %73 = vmatpush1.msra.mxu0 0.0
    %74 = vmatprep.subr.mxu0 0.0
    %75 = vmatpush1.msra.mxu0 0.0
    %76 = vmatprep.subr.mxu0 0.0
    %77 = vmatpush1.msra.mxu0 0.0
    %78 = vmatprep.subr.mxu0 0.0
    %79 = vmatpush1.msra.mxu0 0.0
    %80 = vmatprep.subr.mxu0 0.0
    %81 = vmatpush1.msra.mxu0 0.0
    %82 = vmatprep.subr.mxu0 0.0
    %83 = vmatpush1.msra.mxu0 0.0
    %84 = vmatprep.subr.mxu0 0.0
    %85 = vmatpush1.msra.mxu0 0.0
    %86 = vmatprep.subr.mxu0 0.0
    %87 = vmatpush1.msra.mxu0 0.0
    %88 = vmatprep.subr.mxu0 0.0
    %89 = vmatpush1.msra.mxu0 %v52
    %90 = vmatprep.subr.mxu0 0.0
    %91 = vmatpush1.msra.mxu0 %v51
    %92 = vmatprep.subr.mxu0 0.0
    %93 = vmatpush1.msra.mxu0 %v50
    %94 = vmatprep.subr.mxu0 0.0
    %95 = vmatpush1.msra.mxu0 %v49
    %96 = vmatprep.subr.mxu0 0.0
    %97 = vmatpush2.msra.mxu0 0.0
    %98 = vmatprep.subr.mxu0 0.0
    %99 = vmatpush2.msra.mxu0 0.0
    %100 = vmatprep.subr.mxu0 0.0
    %101 = vmatpush2.msra.mxu0 0.0
    %102 = vmatprep.subr.mxu0 0.0
    %103 = vmatpush2.msra.mxu0 0.0
    %104 = vmatprep.subr.mxu0 0.0
    %105 = vmatpush2.msra.mxu0 0.0
    %106 = vmatprep.subr.mxu0 0.0
    %107 = vmatpush2.msra.mxu0 0.0
    %108 = vmatprep.subr.mxu0 0.0
    %109 = vmatpush2.msra.mxu0 0.0
    %110 = vmatprep.subr.mxu0 0.0
    %111 = vmatpush2.msra.mxu0 0.0
    %112 = vmatprep.subr.mxu0 0.0
    %113 = vmatpush2.msra.mxu0 0.0
    %114 = vmatprep.subr.mxu0 0.0
    %115 = vmatpush2.msra.mxu0 0.0
    %116 = vmatprep.subr.mxu0 0.0
    %117 = vmatpush2.msra.mxu0 0.0
    %118 = vmatprep.subr.mxu0 0.0
    %119 = vmatpush2.msra.mxu0 0.0
    %120 = vmatprep.subr.mxu0 0.0
    %121 = vmatpush2.msra.mxu0 0.0
    %122 = vmatprep.subr.mxu0 0.0
    %123 = vmatpush2.msra.mxu0 0.0
    %124 = vmatprep.subr.mxu0 0.0
    %125 = vmatpush2.msra.mxu0 0.0
    %126 = vmatprep.subr.mxu0 0.0
    %127 = vmatpush2.msra.mxu0 0.0
    %128 = vmatprep.mubr.f32.mxu0 0.0
    %129 = vmatmul.mubr.f32.gmra.mxu0 %v62
    %v130 = vpop.f32.mrf.mxu0
    %v131 = vadd.f32 %v58, %v130
    %v132 = vpop.f32.mrf.mxu0
    %133 = vdwg.mxu0
    %134 = vadd.xlane.f32.xlu0 %v131
    %v135 = vpop.xlane.xlu0 %134
    %v136 = vrcp.pop 128.0
    %v137 = vmul.f32 %v135, %v136
    %v138 = vsub.f32 %v131, %v137
    %v139 = vmul.f32 %v138, %v138
    %140 = vadd.xlane.f32.xlu0 %v139
    %v141 = vpop.xlane.xlu0 %140
    %v142 = vmul.f32 %v141, %v136
    %v143 = vadd.f32 %v142, 1e-05
    %v144 = vrsqrt.pop %v143
    %v145 = vmul.f32 %v138, %v144
    %v146 = vld [vmem:[%s3] sm:$0x1]
    %v148 = vlaneseq
    %v149 = vshrl.u32 %v148, 7
    %v150 = vsub.s32 0, %v149
    %v151 = vrot.slane %v146, %v150
    %v153 = vmul.f32 %v145, %v151
    %v154 = vld [vmem:[%s4] sm:$0x1]
    %v156 = vlaneseq
    %v157 = vshrl.u32 %v156, 7
    %v158 = vsub.s32 0, %v157
    %v159 = vrot.slane %v154, %v158
    %v161 = vadd.f32 %v153, %v159
    %162 = vst [vmem:[#allocation7] sm:$0xff] %v161
    // Predicated region
    $region30: #{tpu_custom_call.1} parent=1 // pred_check
      _
    $region31: #{tpu_custom_call.1} parent=1 // pred_check_branch
      %164 = sbr.rel (0) target = $region33
    $region32: #{tpu_custom_call.1} parent=1 // pred_region
      %s166 = ssub.s32 128, 128
      %167 = vsyncadd [#allocation4], %s166
      %s169 = sshll.u32 [#allocation7], 4
      %s170 = int_to_ptr.vmem [resolvable:$true] %s169
      %172 = dma.vmem_to_hbm [thread:$0]  %s170, 128, %s5, [#allocation4]
    $region33: #{tpu_custom_call.1} parent=1 // pred_fallthru
      _
    // Predicated region
    $region34: #{tpu_custom_call.1} parent=1 // pred_check
      _
    $region35: #{tpu_custom_call.1} parent=1 // pred_check_branch
      %174 = sbr.rel (0) target = $region37
    $region36: #{tpu_custom_call.1} parent=1 // pred_region
      %175 = dma.done [#allocation4], 128
    $region37: #{tpu_custom_call.1} parent=1 // pred_fallthru
      _
    %176 = vsyncpa [#allocation3], 1
    %177 = vsyncpa [#allocation6], 1
    %178 = vsyncpa [#allocation4], 1

</llo_original>
